<compile_context>
chip_gen: v7x
topology: tpu7x:2x2x1
jax: 0.10.0
libtpu: 0.0.40
codegen_flags: <defaults>
</compile_context>

<pallas_src>
import math
import functools

import jax
import jax.numpy as jnp
from jax.experimental import pallas as pl
from jax.experimental.pallas import tpu as pltpu


# ----------------------------------------------------------------------------- PE table ---
def make_pe_table(max_len, d_model, dtype=jnp.float32):
    """Sinusoidal PE table identical to the PyTorch module's `pe` buffer (without the
    leading batch dim): pe[p, 2i] = sin(p * w_i), pe[p, 2i+1] = cos(p * w_i)."""
    position = jnp.arange(max_len, dtype=jnp.float32)[:, None]                  # (L, 1)
    div_term = jnp.exp(jnp.arange(0, d_model, 2, dtype=jnp.float32)
                       * (-(math.log(10000.0) / d_model)))                      # (D/2,)
    angles = position * div_term                                                # (L, D/2)
    pe = jnp.zeros((max_len, d_model), dtype=jnp.float32)
    pe = pe.at[:, 0::2].set(jnp.sin(angles))
    pe = pe.at[:, 1::2].set(jnp.cos(angles))
    return pe.astype(dtype)


@functools.lru_cache(maxsize=None)
def _cached_pe_table(max_len, d_model, dtype_name):
    # Hoists the table build out of the per-call path (built once per (L, D, dtype)).
    return make_pe_table(max_len, d_model, dtype=jnp.dtype(dtype_name))


# ------------------------------------------------------------------------------ kernels ---
def _pe_add_kernel(x_ref, pe_ref, o_ref):
    # x_ref: (tile_b, tile_c), pe_ref: (1, tile_c) -> broadcast over the batch rows.
    o_ref[...] = x_ref[...] + pe_ref[...]


def _pe_add_dropout_kernel(x_ref, pe_ref, bits_ref, o_ref, *, threshold, scale):
    # Integer-threshold dropout: keep iff raw uint32 bits >= round(p * 2^32).
    y = (x_ref[...] + pe_ref[...]) * jnp.asarray(scale, x_ref.dtype)
    keep = bits_ref[...] >= jnp.uint32(threshold)
    o_ref[...] = jnp.where(keep, y, jnp.zeros_like(y))


# ------------------------------------------------------------------------- tile choice ----
def _choose_tiles(B, cols_total, itemsize, block_byte_target):
    """Pick (tile_b, tile_cols) for the 2-D (B, S*D) view.

    Constraints: tile_cols is a multiple of 128 or the full extent; tile_b is a multiple
    of 8 or the full batch.  Targets ~block_byte_target bytes per x block (soft)."""
    row_bytes = cols_total * itemsize
    if row_bytes <= block_byte_target:
        tile_cols = cols_total                                   # full row fits
        rows_fit = max(1, block_byte_target // max(1, row_bytes))
        if rows_fit >= B:
            tile_b = B
        else:
            tile_b = min(B, max(8, (rows_fit // 8) * 8))
    else:
        tile_b = B if B <= 8 else 8
        tile_cols = max(128, (block_byte_target // (tile_b * itemsize) // 128) * 128)
        tile_cols = min(tile_cols, cols_total)
    return tile_b, tile_cols


# ------------------------------------------------------------------------------ wrapper ---
def positional_encoding(x, pe=None, *, dropout_p=0.0, training=False, rng_key=None,
                        max_len=5000, block_byte_target=2 * 1024 * 1024):
    """x: (B, S, D). Returns dropout(x + pe[:S]) with the PyTorch module's semantics.

    `block_byte_target` sizes the per-stream VMEM block (2 MiB keeps the double-buffered
    footprint well inside the v5e 16 MiB scoped default; raise to 4-6 MiB on v6e/v7x).
    Training-mode dropout takes its randomness from `rng_key` (host-generated uint32 bits
    fed to the kernel); in-kernel pltpu.prng_* would save that HBM read on real TPUs but
    does not lower in the CPU interpreter used for testing.
    """
    B, S, D = x.shape

    if pe is None:
        pe = _cached_pe_table(max(S, max_len), D, jnp.dtype(x.dtype).name)
    else:
        pe = jnp.asarray(pe)
        if pe.ndim == 3:                       # PyTorch buffer shape (1, max_len, d_model)
            pe = pe[0]
    if pe.shape[0] < S:
        raise ValueError(f"PE table has {pe.shape[0]} positions but x has seq len {S}.")
    if pe.shape[1] != D:
        raise ValueError(f"PE table d_model {pe.shape[1]} != input d_model {D}.")
    if pe.dtype != x.dtype:
        pe = pe.astype(x.dtype)                # host-side cast: halves pe DMA for bf16

    cols_total = S * D
    itemsize = jnp.dtype(x.dtype).itemsize
    tile_b, tile_cols = _choose_tiles(B, cols_total, itemsize, block_byte_target)

    # Lane-dense 2-D views (free, contiguous reshapes).  pe stays full-length (max_len*D):
    # only the first ceil(S*D / tile_cols) column blocks are ever fetched, so no host slice.
    x2 = x.reshape(B, cols_total)
    pe2 = pe.reshape(1, -1)

    # Grid: columns outer ("parallel" -> megacore splits along the sequence), batch inner
    # ("arbitrary"); pe's block index ignores the batch axis, so it is DMA'd once per
    # column tile (i.e. once in total), not once per batch tile.
    grid = (pl.cdiv(cols_total, tile_cols), pl.cdiv(B, tile_b))

    x_spec = pl.BlockSpec((tile_b, tile_cols), lambda c, b: (b, c))
    pe_spec = pl.BlockSpec((1, tile_cols), lambda c, b: (0, c))
    out_spec = pl.BlockSpec((tile_b, tile_cols), lambda c, b: (b, c))

    compiler_params = pltpu.CompilerParams(
        dimension_semantics=("parallel", "arbitrary"),
        vmem_limit_bytes=48 * 1024 * 1024,     # safe on v5e/v6e (128 MiB) and v7x (64 MiB)
    )

    use_dropout = bool(training) and float(dropout_p) > 0.0
    if use_dropout:
        if rng_key is None:
            raise ValueError("training-mode dropout requires rng_key")
        p = float(dropout_p)
        threshold = min(2 ** 32 - 1, int(round(p * 2.0 ** 32)))
        kernel = functools.partial(_pe_add_dropout_kernel,
                                   threshold=threshold, scale=1.0 / (1.0 - p))
        bits = jax.random.bits(rng_key, (B, cols_total), dtype=jnp.uint32)
        in_specs = [x_spec, pe_spec,
                    pl.BlockSpec((tile_b, tile_cols), lambda c, b: (b, c))]
        args = (x2, pe2, bits)
    else:
        kernel = _pe_add_kernel
        in_specs = [x_spec, pe_spec]
        args = (x2, pe2)

    out2 = pl.pallas_call(
        kernel,
        out_shape=jax.ShapeDtypeStruct((B, cols_total), x.dtype),
        grid_spec=pltpu.PrefetchScalarGridSpec(
            num_scalar_prefetch=0,
            grid=grid,
            in_specs=in_specs,
            out_specs=out_spec,
        ),
        compiler_params=compiler_params,
    )(*args)

    return out2.reshape(B, S, D)


# --------------------------------------------------------------------------------- main ---
if __name__ == "__main__":
    key = jax.random.PRNGKey(0)
    batch, seq, d_model = 2, 8, 32
    max_len = 5000                               # module default

    x = jax.random.normal(key, (batch, seq, d_model), dtype=jnp.float32)
    pe_full = make_pe_table(max_len, d_model)    # the registered buffer (without batch dim)

    # ---- eval mode (dropout = identity): exact check against a pure-JAX reference ----
    out = positional_encoding(x, pe_full, dropout_p=0.1, training=False)
    jax.block_until_ready(out)

    ref = x + pe_full[None, :seq, :]
    assert out.shape == x.shape
    assert jnp.allclose(out, ref, atol=1e-6, rtol=1e-6), "mismatch vs reference (eval)"

    # ---- training mode: every element is either dropped (0) or (x+pe)/(1-p) ----
    p = 0.5
    out_tr = positional_encoding(x, pe_full, dropout_p=p, training=True,
                                 rng_key=jax.random.PRNGKey(123))
    jax.block_until_ready(out_tr)
    assert out_tr.shape == x.shape
    assert bool(jnp.all(jnp.isfinite(out_tr)))
    ok = jnp.isclose(out_tr, 0.0) | jnp.isclose(out_tr, ref / (1.0 - p), atol=1e-5, rtol=1e-5)
    assert bool(jnp.all(ok)), "training-mode dropout produced unexpected values"

    print("KERNEL_OK")
</pallas_src>

<mosaic_0001>
module attributes {stable_mosaic.version = 11 : i64} {
  func.func @_pe_add_kernel(%arg0: i32, %arg1: i32, %arg2: memref<2x256xf32, #tpu.memory_space<vmem>>, %arg3: memref<1x256xf32, #tpu.memory_space<vmem>>, %arg4: memref<2x256xf32, #tpu.memory_space<vmem>>) attributes {dimension_semantics = [#tpu.dimension_semantics<parallel>, #tpu.dimension_semantics<arbitrary>], iteration_bounds = array<i64: 1, 1>, scalar_prefetch = 0 : i64, scratch_operands = 0 : i64, tpu.core_type = #tpu.core_type<tc>, window_params = [{transform_indices = @transform_0, window_bounds = array<i64: 2, 256>}, {transform_indices = @transform_1, window_bounds = array<i64: 1, 256>}, {transform_indices = @transform_2, window_bounds = array<i64: 2, 256>}]} {
    %c0 = arith.constant 0 : index
    %c0_0 = arith.constant 0 : index
    %0 = vector.load %arg2[%c0, %c0_0] : memref<2x256xf32, #tpu.memory_space<vmem>>, vector<2x256xf32>
    %c0_1 = arith.constant 0 : index
    %c0_2 = arith.constant 0 : index
    %1 = vector.load %arg3[%c0_1, %c0_2] : memref<1x256xf32, #tpu.memory_space<vmem>>, vector<1x256xf32>
    %2 = vector.broadcast %1 : vector<1x256xf32> to vector<2x256xf32>
    %3 = arith.addf %0, %2 : vector<2x256xf32>
    %c0_3 = arith.constant 0 : index
    %c0_4 = arith.constant 0 : index
    %4 = vector.load %arg4[%c0_3, %c0_4] : memref<2x256xf32, #tpu.memory_space<vmem>>, vector<2x256xf32>
    tpu.vector_store %arg4[%c0_3, %c0_4], %3 {strides = array<i32>} : memref<2x256xf32, #tpu.memory_space<vmem>>, vector<2x256xf32>,
    return
  }
  func.func @transform_0(%arg0: i32, %arg1: i32) -> (i32, i32) {
    %c0_i32 = arith.constant 0 : i32
    return %arg1, %arg0 : i32, i32
  }
  func.func @transform_1(%arg0: i32, %arg1: i32) -> (i32, i32) {
    %c0_i32 = arith.constant 0 : i32
    %c0_i32_0 = arith.constant 0 : i32
    return %c0_i32, %arg0 : i32, i32
  }
  func.func @transform_2(%arg0: i32, %arg1: i32) -> (i32, i32) {
    %c0_i32 = arith.constant 0 : i32
    return %arg1, %arg0 : i32, i32
  }
}

</mosaic_0001>

<llo_original>
// kernel: tpu_custom_call.1
$region0: #{tpu_custom_call.1}
  #allocation0 [shape = 'u32[]', space=smem, size = 0x4, offset = 0x4, fixed_abs, tag = 'smem constant byte address 0x4 - core index']
  #allocation1 [shape = 'u32[144,128]{1,0:T(1,128)}', space=vmem, size = 0x12000, scoped, tag = 'internal scratch']
  %s0 = inlined_call_operand.hbm [shape: f32[2,256], index: 0, kind: input, shape index: {}]
  %s1 = inlined_call_operand.hbm [shape: f32[1,160000], index: 1, kind: input, shape index: {}]
  %s2 = inlined_call_operand.hbm [shape: f32[2,256], index: 2, kind: output, shape index: {}]
  %s3 = sld [smem:[#allocation0]]
  $region26: #{tpu_custom_call.1} parent=0
    _
  %s5 = ssub.s32 1, %s3
  %s6 = scalar_select 0, %s5, %s3
  $region1: #{tpu_custom_call.1} parent=0
    #allocation2 [shape = 'u8[2048]{0}', space=vmem, size = 0x800, scoped, tag = 'input window, operand 0, single buffered']
    #allocation3 [shape = 's32[1]{0}', space=sflag, size = 0x4, scoped, tag = 'scoped memory for tpu_custom_call.1']
    #allocation4 [shape = 's32[1]{0}', space=sflag, size = 0x4, scoped, tag = 'scoped memory for tpu_custom_call.1']
    #allocation5 [shape = 'u8[1024]{0}', space=vmem, size = 0x400, scoped, tag = 'input window, operand 1, single buffered']
    #allocation6 [shape = 's32[1]{0}', space=sflag, size = 0x4, scoped, tag = 'scoped memory for tpu_custom_call.1']
    #allocation7 [shape = 'u8[2048]{0}', space=vmem, size = 0x800, scoped, tag = 'output window, operand 0, single buffered']
    %7 = vsyncpa [#allocation3], 0
    %8 = vsyncpa [#allocation6], 0
    %9 = vsyncpa [#allocation4], 0
    // Predicated region
    $region2: #{tpu_custom_call.1} parent=1 // pred_check
      _
    $region3: #{tpu_custom_call.1} parent=1 // pred_check_branch
      %11 = sbr.rel (0) target = $region5
    $region4: #{tpu_custom_call.1} parent=1 // pred_region
      %s13 = ssub.s32 64, 64
      %14 = vsyncadd [#allocation3], %s13
      %s16 = sshll.u32 [#allocation2], 4
      %s17 = int_to_ptr.vmem [resolvable:$true] %s16
      %19 = dma.hbm_to_vmem [thread:$0]  %s0, 64, %s17, [#allocation3]
    $region5: #{tpu_custom_call.1} parent=1 // pred_fallthru
      _
    // Predicated region
    $region6: #{tpu_custom_call.1} parent=1 // pred_check
      _
    $region7: #{tpu_custom_call.1} parent=1 // pred_check_branch
      %21 = sbr.rel (0) target = $region9
    $region8: #{tpu_custom_call.1} parent=1 // pred_region
      %s23 = ssub.s32 32, 32
      %24 = vsyncadd [#allocation6], %s23
      %s26 = sshll.u32 [#allocation5], 4
      %s27 = int_to_ptr.vmem [resolvable:$true] %s26
      %29 = dma.hbm_to_vmem [thread:$0]  %s1, 32, %s27, [#allocation6]
    $region9: #{tpu_custom_call.1} parent=1 // pred_fallthru
      _
    // Predicated region
    $region10: #{tpu_custom_call.1} parent=1 // pred_check
      _
    $region11: #{tpu_custom_call.1} parent=1 // pred_check_branch
      %31 = sbr.rel (0) target = $region13
    $region12: #{tpu_custom_call.1} parent=1 // pred_region
      %32 = dma.done [#allocation3], 64
    $region13: #{tpu_custom_call.1} parent=1 // pred_fallthru
      _
    // Predicated region
    $region14: #{tpu_custom_call.1} parent=1 // pred_check
      _
    $region15: #{tpu_custom_call.1} parent=1 // pred_check_branch
      %34 = sbr.rel (0) target = $region17
    $region16: #{tpu_custom_call.1} parent=1 // pred_region
      %35 = dma.done [#allocation6], 32
    $region17: #{tpu_custom_call.1} parent=1 // pred_fallthru
      _
    %v36 = vld [vmem:[#allocation2] sm:$0xf]
    %v37 = vld [vmem:[#allocation5] sm:$0x3]
    %v39 = vlaneseq
    %v40 = vshrl.u32 %v39, 7
    %v41 = vsub.s32 0, %v40
    %v42 = vrot.slane %v37, %v41
    %v43 = vlaneseq
    %v44 = vshrl.u32 %v43, 7
    %v45 = vsub.s32 1, %v44
    %v46 = vrot.slane %v37, %v45
    %v47 = vcombine.low %v42, %v46
    %v49 = vunpack.c.l.s4 1983009808
    %v50 = vunpack.c.0.s8 %v49
    %v51 = vlaneseq
    %v52 = vshrl.u32 %v51, 7
    %v53 = vsub.s32 %v50, %v52
    %v54 = vrot.slane %v47, %v53
    %v56 = vadd.f32 %v36, %v54
    %57 = vst [vmem:[#allocation7] sm:$0xf] %v56
    // Predicated region
    $region18: #{tpu_custom_call.1} parent=1 // pred_check
      _
    $region19: #{tpu_custom_call.1} parent=1 // pred_check_branch
      %59 = sbr.rel (0) target = $region21
    $region20: #{tpu_custom_call.1} parent=1 // pred_region
      %s61 = ssub.s32 64, 64
      %62 = vsyncadd [#allocation4], %s61
      %s64 = sshll.u32 [#allocation7], 4
      %s65 = int_to_ptr.vmem [resolvable:$true] %s64
      %67 = dma.vmem_to_hbm [thread:$0]  %s65, 64, %s2, [#allocation4]
    $region21: #{tpu_custom_call.1} parent=1 // pred_fallthru
      _
    // Predicated region
    $region22: #{tpu_custom_call.1} parent=1 // pred_check
      _
    $region23: #{tpu_custom_call.1} parent=1 // pred_check_branch
      %69 = sbr.rel (0) target = $region25
    $region24: #{tpu_custom_call.1} parent=1 // pred_region
      %70 = dma.done [#allocation4], 64
    $region25: #{tpu_custom_call.1} parent=1 // pred_fallthru
      _
    %71 = vsyncpa [#allocation3], 1
    %72 = vsyncpa [#allocation6], 1
    %73 = vsyncpa [#allocation4], 1

</llo_original>
